<compile_context>
chip_gen: v6e
topology: v6e:2x2x1
jax: 0.10.0
libtpu: 0.0.40
codegen_flags: <defaults>
</compile_context>

<pallas_src>
import jax
import jax.numpy as jnp
from jax.experimental import pallas as pl
from jax.experimental.pallas import tpu as pltpu


def critic_head_kernel(x_ref, w_ref, b_ref, o_ref):
    # x_ref: (tile_b, D) activations, w_ref: (1, D) weight row,
    # b_ref: (1,) f32 scalar in SMEM, o_ref: (tile_b, 1).
    x = x_ref[...].astype(jnp.float32)            # widen (bf16-safe on v5e)
    w = w_ref[...].astype(jnp.float32)            # (1, D) broadcast over sublanes
    acc = jnp.sum(x * w, axis=-1, keepdims=True)  # lane reduce (XLU), f32 accumulate
    o_ref[...] = (acc + b_ref[0]).astype(o_ref.dtype)


def _pick_tile_b(B, D, itemsize, *, target_block_bytes=2 << 20, min_grid_steps=4):
    """Rows per block: big enough to approach the HBM roofline (~1-4 MiB
    blocks), small enough that double-buffered blocks fit every generation's
    scoped VMEM, and a multiple of 8 whenever the block does not cover B."""
    if B <= 8:
        return B                                       # tiny batch: one block
    rows_for_bytes = max(8, target_block_bytes // max(1, D * itemsize))
    rows_for_grid = max(8, B // min_grid_steps)        # keep several steps in flight
    rows = min(rows_for_bytes, rows_for_grid)
    rows = max(8, (rows // 8) * 8)                     # Mosaic sublane constraint
    return B if rows >= B else rows


def critic_head(x, weight, bias, *, tile_b=None):
    """x: (B, D); weight: (1, D); bias: (1,)  ->  (B, 1)  (== torch nn.Linear(D, 1))."""
    B, D = x.shape
    w_row = weight.reshape(1, D)                       # keep lane-dense (NO (D,1) transpose)
    b_smem = bias.reshape(1).astype(jnp.float32)       # scalar bias, lives in SMEM

    if tile_b is None:
        tile_b = _pick_tile_b(B, D, x.dtype.itemsize)
    else:
        tile_b = min(int(tile_b), B)
        if tile_b < B and tile_b % 8 != 0:             # sanitize user-supplied tiles
            tile_b = max(8, (tile_b // 8) * 8)

    grid = (pl.cdiv(B, tile_b),)                       # partial last block is masked

    return pl.pallas_call(
        critic_head_kernel,
        out_shape=jax.ShapeDtypeStruct((B, 1), x.dtype),
        grid_spec=pltpu.PrefetchScalarGridSpec(
            num_scalar_prefetch=0,
            grid=grid,
            in_specs=[
                pl.BlockSpec((tile_b, D), lambda i: (i, 0)),           # stream x
                pl.BlockSpec((1, D), lambda i: (0, 0)),                # resident weight row
                pl.BlockSpec(memory_space=pltpu.MemorySpace.SMEM),     # scalar bias
            ],
            out_specs=pl.BlockSpec((tile_b, 1), lambda i: (i, 0)),
        ),
        compiler_params=pltpu.CompilerParams(
            # Independent batch blocks -> shards across both TCs on v7x.
            dimension_semantics=("parallel",)
        ),
    )(x, w_row, b_smem)


def init_critic_head_params(key, input_size, dtype=jnp.float32):
    # nn.init.orthogonal_ on a (1, input_size) matrix -> a single unit-norm row.
    w = jax.random.normal(key, (1, input_size), dtype=dtype)
    w = w / jnp.linalg.norm(w)
    b = jnp.zeros((1,), dtype=dtype)                   # nn.init.constant_(bias, 0)
    return w, b


if __name__ == "__main__":
    key = jax.random.PRNGKey(0)
    kx, kw, kx2 = jax.random.split(key, 3)

    # Habitat-style tiny shapes: batch=2, hidden=32 (single full-extent block).
    B, D = 2, 32
    x = jax.random.normal(kx, (B, D), dtype=jnp.float32)
    weight, bias = init_critic_head_params(kw, D)

    y = critic_head(x, weight, bias)
    jax.block_until_ready(y)

    y_ref = jnp.sum(x * weight, axis=-1, keepdims=True) + bias  # f32 Linear reference
    assert y.shape == (B, 1)
    assert jnp.allclose(y, y_ref, atol=1e-5, rtol=1e-5)

    # Larger batch to exercise the tiled / double-buffered / multi-step path.
    B2, D2 = 2048, 256
    x2 = jax.random.normal(kx2, (B2, D2), dtype=jnp.float32)
    w2, b2 = init_critic_head_params(kw, D2)

    y2 = critic_head(x2, w2, b2)
    jax.block_until_ready(y2)

    y2_ref = jnp.sum(x2 * w2, axis=-1, keepdims=True) + b2
    assert y2.shape == (B2, 1)
    assert jnp.allclose(y2, y2_ref, atol=1e-4, rtol=1e-4)

    print("KERNEL_OK")
</pallas_src>

<mosaic_0001>
module attributes {stable_mosaic.version = 11 : i64} {
  func.func @critic_head_kernel(%arg0: i32, %arg1: memref<2x32xf32, #tpu.memory_space<vmem>>, %arg2: memref<1x32xf32, #tpu.memory_space<vmem>>, %arg3: memref<1xf32, #tpu.memory_space<smem>>, %arg4: memref<2x1xf32, #tpu.memory_space<vmem>>) attributes {dimension_semantics = [#tpu.dimension_semantics<parallel>], iteration_bounds = array<i64: 1>, scalar_prefetch = 0 : i64, scratch_operands = 0 : i64, tpu.core_type = #tpu.core_type<tc>, window_params = [{transform_indices = @transform_0, window_bounds = array<i64: 2, 32>}, {pipeline_mode = #tpu.pipeline_mode<synchronous>, transform_indices = @transform_1, window_bounds = array<i64: 1, 32>}, {transform_indices = @transform_2, window_bounds = array<i64: 1>}, {transform_indices = @transform_3, window_bounds = array<i64: 2, 1>}]} {
    %c0 = arith.constant 0 : index
    %c0_0 = arith.constant 0 : index
    %0 = vector.load %arg1[%c0, %c0_0] : memref<2x32xf32, #tpu.memory_space<vmem>>, vector<2x32xf32>
    %c0_1 = arith.constant 0 : index
    %c0_2 = arith.constant 0 : index
    %1 = vector.load %arg2[%c0_1, %c0_2] : memref<1x32xf32, #tpu.memory_space<vmem>>, vector<1x32xf32>
    %2 = vector.broadcast %1 : vector<1x32xf32> to vector<2x32xf32>
    %3 = arith.mulf %0, %2 : vector<2x32xf32>
    %cst = arith.constant dense<0.000000e+00> : vector<2xf32>
    %4 = vector.multi_reduction <add>, %3, %cst [1] : vector<2x32xf32> to vector<2xf32>
    %5 = vector.shape_cast %4 : vector<2xf32> to vector<2x1xf32>
    %c0_3 = arith.constant 0 : index
    %6 = memref.load %arg3[%c0_3] : memref<1xf32, #tpu.memory_space<smem>>
    %7 = vector.broadcast %6 : f32 to vector<2x1xf32>
    %8 = arith.addf %5, %7 : vector<2x1xf32>
    %c0_4 = arith.constant 0 : index
    %c0_5 = arith.constant 0 : index
    %9 = vector.load %arg4[%c0_4, %c0_5] : memref<2x1xf32, #tpu.memory_space<vmem>>, vector<2x1xf32>
    tpu.vector_store %arg4[%c0_4, %c0_5], %8 {strides = array<i32>} : memref<2x1xf32, #tpu.memory_space<vmem>>, vector<2x1xf32>,
    return
  }
  func.func @transform_0(%arg0: i32) -> (i32, i32) {
    %c0_i32 = arith.constant 0 : i32
    %c0_i32_0 = arith.constant 0 : i32
    return %arg0, %c0_i32 : i32, i32
  }
  func.func @transform_1(%arg0: i32) -> (i32, i32) {
    %c0_i32 = arith.constant 0 : i32
    %c0_i32_0 = arith.constant 0 : i32
    %c0_i32_1 = arith.constant 0 : i32
    return %c0_i32, %c0_i32_0 : i32, i32
  }
  func.func @transform_2(%arg0: i32) -> i32 {
    %c0_i32 = arith.constant 0 : i32
    %c0_i32_0 = arith.constant 0 : i32
    return %c0_i32 : i32
  }
  func.func @transform_3(%arg0: i32) -> (i32, i32) {
    %c0_i32 = arith.constant 0 : i32
    %c0_i32_0 = arith.constant 0 : i32
    return %arg0, %c0_i32 : i32, i32
  }
}

</mosaic_0001>

<llo_original>
// kernel: tpu_custom_call.1
$region0: #{tpu_custom_call.1}
  #allocation0 [shape = 'u32[]', space=smem, size = 0x4, offset = 0x4, fixed_abs, tag = 'smem constant byte address 0x4 - core index']
  #allocation1 [shape = 'u32[144,128]{1,0:T(1,128)}', space=vmem, size = 0x12000, scoped, tag = 'internal scratch']
  #allocation2 [shape = 'f32[1]{0:T(128)S(6)}', space=smem, size = 0x200, scoped, tag = 'scoped memory for tpu_custom_call.1']
  %s0 = inlined_call_operand.vmem [shape: f32[2,32], index: 0, kind: input, shape index: {}]
  %s1 = inlined_call_operand.vmem [shape: f32[1,32], index: 1, kind: input, shape index: {}]
  %s2 = inlined_call_operand.<no memory space> [shape: f32[1], index: 2, kind: input, shape index: {}]
  %s3 = inlined_call_operand.vmem [shape: f32[2,1], index: 3, kind: output, shape index: {}]
  %s4 = sld [smem:[#allocation0]]
  $region22: #{tpu_custom_call.1} parent=0
    _
  %s6 = ssub.s32 1, %s4
  %s7 = scalar_select 0, %s6, %s4
  %8 = sst [smem:[#allocation2]] %s2
  // Predicated region
  $region2: #{tpu_custom_call.1} parent=0 // pred_check
    _
  $region3: #{tpu_custom_call.1} parent=0 // pred_check_branch
    %10 = sbr.rel (0) target = $region5
  $region4: #{tpu_custom_call.1} parent=0 // pred_region
    _
  $region5: #{tpu_custom_call.1} parent=0 // pred_fallthru
    _
  // Predicated region
  $region6: #{tpu_custom_call.1} parent=0 // pred_check
    _
  $region7: #{tpu_custom_call.1} parent=0 // pred_check_branch
    %12 = sbr.rel (0) target = $region9
  $region8: #{tpu_custom_call.1} parent=0 // pred_region
    _
  $region9: #{tpu_custom_call.1} parent=0 // pred_fallthru
    _
  // Predicated region
  $region10: #{tpu_custom_call.1} parent=0 // pred_check
    _
  $region11: #{tpu_custom_call.1} parent=0 // pred_check_branch
    %14 = sbr.rel (0) target = $region13
  $region12: #{tpu_custom_call.1} parent=0 // pred_region
    _
  $region13: #{tpu_custom_call.1} parent=0 // pred_fallthru
    _
  %v15 = vld [vmem:[%s0] sm:$0x3]
  %v16 = vld [vmem:[%s1] sm:$0x1]
  %v18 = vlaneseq
  %v19 = vshrl.u32 %v18, 7
  %v20 = vsub.s32 0, %v19
  %v21 = vrot.slane %v16, %v20
  %v23 = vmul.f32 %v15, %v21
  %vm24 = vcmask 254976
  %v25 = vsel %vm24, %v23, 0.0
  %26 = vadd.xlane.f32.xlu0 %v25
  %v27 = vpop.xlane.xlu0 %26
  %s28 = sld [smem:[#allocation2]]
  %v29 = vstv %s28
  %v30 = vadd.f32 %v27, %v29
  %vm31 = vcmask 1024
  %32 = vst.msk [vmem:[%s3] sm:$0x3] %vm31, %v30
  // Predicated region
  $region14: #{tpu_custom_call.1} parent=0 // pred_check
    _
  $region15: #{tpu_custom_call.1} parent=0 // pred_check_branch
    %34 = sbr.rel (0) target = $region17
  $region16: #{tpu_custom_call.1} parent=0 // pred_region
    _
  $region17: #{tpu_custom_call.1} parent=0 // pred_fallthru
    _
  // Predicated region
  $region18: #{tpu_custom_call.1} parent=0 // pred_check
    _
  $region19: #{tpu_custom_call.1} parent=0 // pred_check_branch
    %36 = sbr.rel (0) target = $region21
  $region20: #{tpu_custom_call.1} parent=0 // pred_region
    _
  $region21: #{tpu_custom_call.1} parent=0 // pred_fallthru
    _

</llo_original>
